<compile_context>
chip_gen: v7x
topology: tpu7x:2x2x1
jax: 0.10.0
libtpu: 0.0.40
codegen_flags: <defaults>
</compile_context>

<pallas_src>
import functools
import math

import jax
import jax.numpy as jnp
from jax.experimental import pallas as pl
from jax.experimental.pallas import tpu as pltpu

MIN_NORM = 1e-15
BALL_EPS = 4e-3        # Poincare ball boundary epsilon for float32 (HGCN convention)
ARTANH_EPS = 1e-7      # f32-aware clamp (1 - 1e-15 is exactly 1.0 in float32)


def _round_up(n, m):
    return ((n + m - 1) // m) * m


def _artanh(z):
    z = jnp.clip(z, -1.0 + ARTANH_EPS, 1.0 - ARTANH_EPS)
    return 0.5 * jnp.log((1.0 + z) / (1.0 - z))


def _project(v, sqrt_c):
    """Exact projection onto the open Poincare ball (wrapper / reference)."""
    norm = jnp.maximum(jnp.sqrt(jnp.sum(v * v, axis=-1, keepdims=True)), MIN_NORM)
    maxnorm = (1.0 - BALL_EPS) / sqrt_c
    return jnp.where(norm > maxnorm, v / norm * maxnorm, v)


def _project_fast(v, sqrt_c):
    """In-kernel projection: one narrow per-row divide, full-width multiply."""
    norm = jnp.maximum(jnp.sqrt(jnp.sum(v * v, axis=-1, keepdims=True)), MIN_NORM)
    maxnorm = (1.0 - BALL_EPS) / sqrt_c
    scale = maxnorm / norm                                   # (bm, 1) narrow divide
    return jnp.where(norm > maxnorm, v * scale, v)


def _hyp_linear_kernel(x_ref, w_ref, hb_ref, o_ref, *, c):
    cf = jnp.float32(c)
    sqrt_c = jnp.float32(math.sqrt(c))
    inv_sqrt_c = jnp.float32(1.0 / math.sqrt(c))

    x_native = x_ref[...]                                    # (bm, in_p), native dtype
    w_native = w_ref[...]                                    # (in_p, out_p), native dtype
    hb = hb_ref[...].astype(jnp.float32)                     # (1, out_p) precomputed expmap0(bias)

    x = x_native.astype(jnp.float32)                         # f32 for elementwise/norm math

    # ---- mobius_matvec(W, x, c) ----
    ss_x = jnp.sum(x * x, axis=-1, keepdims=True)            # (bm, 1)
    x_norm = jnp.maximum(jnp.sqrt(ss_x), MIN_NORM)
    inv_x_norm = 1.0 / x_norm                                # narrow divide

    # MXU hot path: native-dtype operands, f32 accumulation, natural (K, N) RHS.
    mx = jnp.dot(x_native, w_native, preferred_element_type=jnp.float32)  # (bm, out_p)
    ss_mx = jnp.sum(mx * mx, axis=-1, keepdims=True)         # (bm, 1)
    mx_norm = jnp.maximum(jnp.sqrt(ss_mx), MIN_NORM)
    inv_mx_norm = 1.0 / mx_norm                              # narrow divide

    gain = (jnp.tanh(mx_norm * inv_x_norm * _artanh(sqrt_c * x_norm))
            * (inv_mx_norm * inv_sqrt_c))                    # (bm, 1)
    res = mx * gain
    # zero-row handling reuses the sum-of-squares reduction already computed
    res = jnp.where(ss_mx == 0.0, jnp.zeros_like(res), res)

    # ---- proj(mv, c) ----
    res = _project_fast(res, sqrt_c)

    # ---- mobius_add(res, hyp_bias, c)  (hyp_bias hoisted to the wrapper) ----
    x2 = jnp.sum(res * res, axis=-1, keepdims=True)          # (bm, 1)
    y2 = jnp.sum(hb * hb, axis=-1, keepdims=True)            # (1, 1)
    xy = jnp.sum(res * hb, axis=-1, keepdims=True)           # (bm, 1)
    num = (1.0 + 2.0 * cf * xy + cf * y2) * res + (1.0 - cf * x2) * hb
    denom = 1.0 + 2.0 * cf * xy + cf * cf * x2 * y2          # (bm, 1)
    out = num * (1.0 / jnp.maximum(denom, MIN_NORM))         # narrow divide, wide multiply

    # ---- final proj ----
    out = _project_fast(out, sqrt_c)
    o_ref[...] = out.astype(o_ref.dtype)


def hyp_linear(x, weight, bias, *, c=1.0, block_m=256):
    """x: (B, in_f), weight: (out_f, in_f), bias: (out_f,) -> (B, out_f)."""
    B, in_f = x.shape
    out_f, in_f_w = weight.shape
    assert in_f_w == in_f
    sqrt_c = math.sqrt(c)

    # Lane-dense padding: zero feature columns contribute exactly 0 to every
    # dot / norm in this kernel, so padding is numerically exact.
    in_p = _round_up(in_f, 128)
    out_p = _round_up(out_f, 128)

    # Row tile: multiple of 8, as large as requested; keep >= 2 grid steps when
    # possible so the "parallel" batch axis shards over both v7x TensorCores.
    bm = min(_round_up(block_m, 8), _round_up(B, 8))
    if B > 8 and pl.cdiv(B, bm) < 2:
        bm = _round_up(pl.cdiv(B, 2), 8)
    B_p = _round_up(B, bm)
    grid_m = B_p // bm

    x_p = jnp.pad(x, ((0, B_p - B), (0, in_p - in_f)))
    # Pre-transpose the weight in the wrapper (one-time HLO transpose) so the
    # kernel sees the natural (K, N) MXU layout and needs no in-kernel w.T.
    w_t = jnp.pad(weight.T, ((0, in_p - in_f), (0, out_p - out_f)))

    # Bias path hoisted out of the sequential grid loop:
    # proj_tan0 (identity) -> expmap0 -> proj, computed once per call.
    u = bias.astype(jnp.float32).reshape(1, out_f)
    u_norm = jnp.maximum(jnp.sqrt(jnp.sum(u * u, axis=-1, keepdims=True)), MIN_NORM)
    hyp_bias = jnp.tanh(sqrt_c * u_norm) * u / (sqrt_c * u_norm)
    hyp_bias = _project(hyp_bias, sqrt_c)
    hyp_bias = jnp.pad(hyp_bias, ((0, 0), (0, out_p - out_f)))

    # VMEM budget: double-buffered x/out tiles + resident (revisited) weight +
    # bias row, with 2x headroom; clamped to [32 MiB, 64 MiB] so the same
    # setting is safe on v5e/v6e (128 MiB physical) and v7x (64 MiB physical).
    xb = jnp.dtype(x.dtype).itemsize
    wb = jnp.dtype(weight.dtype).itemsize
    est = (2 * bm * in_p * xb + 2 * bm * out_p * xb
           + 2 * in_p * out_p * wb + 2 * out_p * 4)
    vmem_limit = int(min(max(2 * est, 32 * 1024 * 1024), 64 * 1024 * 1024))

    kernel = functools.partial(_hyp_linear_kernel, c=float(c))
    out_full = pl.pallas_call(
        kernel,
        out_shape=jax.ShapeDtypeStruct((B_p, out_p), x.dtype),
        grid_spec=pltpu.PrefetchScalarGridSpec(
            num_scalar_prefetch=0,
            grid=(grid_m,),
            in_specs=[
                pl.BlockSpec((bm, in_p), lambda i: (i, 0)),      # x row tile
                pl.BlockSpec((in_p, out_p), lambda i: (0, 0)),   # weight (constant block, DMA'd once)
                pl.BlockSpec((1, out_p), lambda i: (0, 0)),      # precomputed hyp_bias row
            ],
            out_specs=pl.BlockSpec((bm, out_p), lambda i: (i, 0)),
        ),
        compiler_params=pltpu.CompilerParams(
            dimension_semantics=("parallel",),
            vmem_limit_bytes=vmem_limit,
        ),
    )(x_p, w_t, hyp_bias)
    return out_full[:B, :out_f]


# ---------------- pure-JAX reference (correctness oracle) ----------------
def hyp_linear_ref(x, weight, bias, c=1.0):
    sqrt_c = math.sqrt(c)
    x_norm = jnp.maximum(jnp.linalg.norm(x, axis=-1, keepdims=True), MIN_NORM)
    mx = x @ weight.T
    mx_norm = jnp.maximum(jnp.linalg.norm(mx, axis=-1, keepdims=True), MIN_NORM)
    res_c = jnp.tanh(mx_norm / x_norm * _artanh(sqrt_c * x_norm)) * mx / (mx_norm * sqrt_c)
    res = jnp.where(jnp.all(mx == 0.0, axis=-1, keepdims=True), 0.0, res_c)
    res = _project(res, sqrt_c)
    u = bias.reshape(1, -1)
    u_norm = jnp.maximum(jnp.linalg.norm(u, axis=-1, keepdims=True), MIN_NORM)
    hb = _project(jnp.tanh(sqrt_c * u_norm) * u / (sqrt_c * u_norm), sqrt_c)
    x2 = jnp.sum(res * res, -1, keepdims=True)
    y2 = jnp.sum(hb * hb, -1, keepdims=True)
    xy = jnp.sum(res * hb, -1, keepdims=True)
    num = (1 + 2 * c * xy + c * y2) * res + (1 - c * x2) * hb
    den = 1 + 2 * c * xy + c * c * x2 * y2
    return _project(num / jnp.maximum(den, MIN_NORM), sqrt_c)


if __name__ == "__main__":
    c = 1.0
    key = jax.random.PRNGKey(0)
    kx, kw, kx2, kw2, kb2 = jax.random.split(key, 5)

    # --- case 1: original small shapes, xavier weight, zero bias ---
    B, in_features, out_features = 16, 32, 32
    gain = math.sqrt(2.0)
    bound = gain * math.sqrt(6.0 / (in_features + out_features))
    weight = jax.random.uniform(kw, (out_features, in_features), jnp.float32,
                                minval=-bound, maxval=bound)
    bias = jnp.zeros((out_features,), jnp.float32)
    x = 0.1 * jax.random.normal(kx, (B, in_features), jnp.float32)

    out = jax.block_until_ready(hyp_linear(x, weight, bias, c=c))
    ref = hyp_linear_ref(x, weight, bias, c=c)
    assert out.shape == (B, out_features)
    assert jnp.allclose(out, ref, atol=2e-5, rtol=2e-5), "mismatch vs reference (case 1)"

    # --- case 2: ragged batch / non-128 features / nonzero bias (exercises
    #     the cdiv grid, row padding and lane padding paths) ---
    B2, in2, out2 = 10, 48, 24
    bound2 = math.sqrt(2.0) * math.sqrt(6.0 / (in2 + out2))
    weight2 = jax.random.uniform(kw2, (out2, in2), jnp.float32,
                                 minval=-bound2, maxval=bound2)
    bias2 = 0.01 * jax.random.normal(kb2, (out2,), jnp.float32)
    x2 = 0.05 * jax.random.normal(kx2, (B2, in2), jnp.float32)

    out2_k = jax.block_until_ready(hyp_linear(x2, weight2, bias2, c=c))
    ref2 = hyp_linear_ref(x2, weight2, bias2, c=c)
    assert out2_k.shape == (B2, out2)
    assert jnp.allclose(out2_k, ref2, atol=2e-5, rtol=2e-5), "mismatch vs reference (case 2)"

    print("KERNEL_OK")
</pallas_src>

<mosaic_0001>
module attributes {stable_mosaic.version = 11 : i64} {
  func.func @_hyp_linear_kernel(%arg0: i32, %arg1: memref<8x128xf32, #tpu.memory_space<vmem>>, %arg2: memref<128x128xf32, #tpu.memory_space<vmem>>, %arg3: memref<1x128xf32, #tpu.memory_space<vmem>>, %arg4: memref<8x128xf32, #tpu.memory_space<vmem>>) attributes {dimension_semantics = [#tpu.dimension_semantics<parallel>], iteration_bounds = array<i64: 2>, scalar_prefetch = 0 : i64, scratch_operands = 0 : i64, tpu.core_type = #tpu.core_type<tc>, window_params = [{transform_indices = @transform_0, window_bounds = array<i64: 8, 128>}, {pipeline_mode = #tpu.pipeline_mode<synchronous>, transform_indices = @transform_1, window_bounds = array<i64: 128, 128>}, {pipeline_mode = #tpu.pipeline_mode<synchronous>, transform_indices = @transform_2, window_bounds = array<i64: 1, 128>}, {transform_indices = @transform_3, window_bounds = array<i64: 8, 128>}]} {
    %c0 = arith.constant 0 : index
    %c0_0 = arith.constant 0 : index
    %0 = vector.load %arg1[%c0, %c0_0] : memref<8x128xf32, #tpu.memory_space<vmem>>, vector<8x128xf32>
    %c0_1 = arith.constant 0 : index
    %c0_2 = arith.constant 0 : index
    %1 = vector.load %arg2[%c0_1, %c0_2] : memref<128x128xf32, #tpu.memory_space<vmem>>, vector<128x128xf32>
    %c0_3 = arith.constant 0 : index
    %c0_4 = arith.constant 0 : index
    %2 = vector.load %arg3[%c0_3, %c0_4] : memref<1x128xf32, #tpu.memory_space<vmem>>, vector<1x128xf32>
    %3 = arith.mulf %0, %0 : vector<8x128xf32>
    %cst = arith.constant dense<0.000000e+00> : vector<8xf32>
    %4 = vector.multi_reduction <add>, %3, %cst [1] : vector<8x128xf32> to vector<8xf32>
    %5 = vector.shape_cast %4 : vector<8xf32> to vector<8x1xf32>
    %6 = math.sqrt %5 : vector<8x1xf32>
    %cst_5 = arith.constant 1.000000e-15 : f32
    %7 = vector.broadcast %cst_5 : f32 to vector<8x1xf32>
    %8 = arith.maximumf %6, %7 : vector<8x1xf32>
    %cst_6 = arith.constant 1.000000e+00 : f32
    %9 = vector.broadcast %cst_6 : f32 to vector<8x1xf32>
    %10 = arith.divf %9, %8 : vector<8x1xf32>
    %cst_7 = arith.constant dense<0.000000e+00> : vector<8x128xf32>
    %11 = tpu.matmul %0, %1, %cst_7 {dimension_numbers = #tpu.dot_dimension_numbers<[1], [0], [0], [1], [0, 0, 1, 1], [], []>} : vector<8x128xf32>, vector<128x128xf32>, vector<8x128xf32> -> vector<8x128xf32>
    %12 = arith.mulf %11, %11 : vector<8x128xf32>
    %cst_8 = arith.constant dense<0.000000e+00> : vector<8xf32>
    %13 = vector.multi_reduction <add>, %12, %cst_8 [1] : vector<8x128xf32> to vector<8xf32>
    %14 = vector.shape_cast %13 : vector<8xf32> to vector<8x1xf32>
    %15 = math.sqrt %14 : vector<8x1xf32>
    %cst_9 = arith.constant 1.000000e-15 : f32
    %16 = vector.broadcast %cst_9 : f32 to vector<8x1xf32>
    %17 = arith.maximumf %15, %16 : vector<8x1xf32>
    %cst_10 = arith.constant 1.000000e+00 : f32
    %18 = vector.broadcast %cst_10 : f32 to vector<8x1xf32>
    %19 = arith.divf %18, %17 : vector<8x1xf32>
    %20 = arith.mulf %17, %10 : vector<8x1xf32>
    %cst_11 = arith.constant 1.000000e+00 : f32
    %21 = vector.broadcast %cst_11 : f32 to vector<8x1xf32>
    %22 = arith.mulf %21, %8 : vector<8x1xf32>
    %cst_12 = arith.constant -0.99999988 : f32
    %cst_13 = arith.constant 0.99999988 : f32
    %23 = vector.broadcast %cst_12 : f32 to vector<8x1xf32>
    %24 = arith.maximumf %23, %22 : vector<8x1xf32>
    %25 = vector.broadcast %cst_13 : f32 to vector<8x1xf32>
    %26 = arith.minimumf %25, %24 : vector<8x1xf32>
    %cst_14 = arith.constant 1.000000e+00 : f32
    %27 = vector.broadcast %cst_14 : f32 to vector<8x1xf32>
    %28 = arith.addf %27, %26 : vector<8x1xf32>
    %cst_15 = arith.constant 1.000000e+00 : f32
    %29 = vector.broadcast %cst_15 : f32 to vector<8x1xf32>
    %30 = arith.subf %29, %26 : vector<8x1xf32>
    %31 = arith.divf %28, %30 : vector<8x1xf32>
    %32 = math.log %31 : vector<8x1xf32>
    %cst_16 = arith.constant 5.000000e-01 : f32
    %33 = vector.broadcast %cst_16 : f32 to vector<8x1xf32>
    %34 = arith.mulf %33, %32 : vector<8x1xf32>
    %35 = arith.mulf %20, %34 : vector<8x1xf32>
    %36 = math.tanh %35 : vector<8x1xf32>
    %cst_17 = arith.constant 1.000000e+00 : f32
    %37 = vector.broadcast %cst_17 : f32 to vector<8x1xf32>
    %38 = arith.mulf %19, %37 : vector<8x1xf32>
    %39 = arith.mulf %36, %38 : vector<8x1xf32>
    %40 = vector.broadcast %39 : vector<8x1xf32> to vector<8x128xf32>
    %41 = arith.mulf %11, %40 : vector<8x128xf32>
    %cst_18 = arith.constant 0.000000e+00 : f32
    %42 = vector.broadcast %cst_18 : f32 to vector<8x1xf32>
    %43 = arith.cmpf oeq, %14, %42 : vector<8x1xf32>
    %cst_19 = arith.constant 0.000000e+00 : f32
    %44 = vector.broadcast %cst_19 : f32 to vector<8x128xf32>
    %45 = vector.shape_cast %43 : vector<8x1xi1> to vector<8x1xi1>
    %46 = vector.broadcast %45 : vector<8x1xi1> to vector<8x128xi1>
    %47 = arith.select %46, %44, %41 : vector<8x128xi1>, vector<8x128xf32>
    %48 = arith.mulf %47, %47 : vector<8x128xf32>
    %cst_20 = arith.constant dense<0.000000e+00> : vector<8xf32>
    %49 = vector.multi_reduction <add>, %48, %cst_20 [1] : vector<8x128xf32> to vector<8xf32>
    %50 = vector.shape_cast %49 : vector<8xf32> to vector<8x1xf32>
    %51 = math.sqrt %50 : vector<8x1xf32>
    %cst_21 = arith.constant 1.000000e-15 : f32
    %52 = vector.broadcast %cst_21 : f32 to vector<8x1xf32>
    %53 = arith.maximumf %51, %52 : vector<8x1xf32>
    %cst_22 = arith.constant 0.995999991 : f32
    %cst_23 = arith.constant 1.000000e+00 : f32
    %54 = arith.divf %cst_22, %cst_23 : f32
    %55 = vector.broadcast %54 : f32 to vector<8x1xf32>
    %56 = arith.divf %55, %53 : vector<8x1xf32>
    %57 = vector.broadcast %54 : f32 to vector<8x1xf32>
    %58 = arith.cmpf ogt, %53, %57 : vector<8x1xf32>
    %59 = vector.broadcast %56 : vector<8x1xf32> to vector<8x128xf32>
    %60 = arith.mulf %47, %59 : vector<8x128xf32>
    %61 = vector.shape_cast %58 : vector<8x1xi1> to vector<8x1xi1>
    %62 = vector.broadcast %61 : vector<8x1xi1> to vector<8x128xi1>
    %63 = arith.select %62, %60, %47 : vector<8x128xi1>, vector<8x128xf32>
    %64 = arith.mulf %63, %63 : vector<8x128xf32>
    %cst_24 = arith.constant dense<0.000000e+00> : vector<8xf32>
    %65 = vector.multi_reduction <add>, %64, %cst_24 [1] : vector<8x128xf32> to vector<8xf32>
    %66 = vector.shape_cast %65 : vector<8xf32> to vector<8x1xf32>
    %67 = arith.mulf %2, %2 : vector<1x128xf32>
    %cst_25 = arith.constant dense<0.000000e+00> : vector<1xf32>
    %68 = vector.multi_reduction <add>, %67, %cst_25 [1] : vector<1x128xf32> to vector<1xf32>
    %69 = vector.shape_cast %68 : vector<1xf32> to vector<1x1xf32>
    %70 = vector.broadcast %2 : vector<1x128xf32> to vector<8x128xf32>
    %71 = arith.mulf %63, %70 : vector<8x128xf32>
    %cst_26 = arith.constant dense<0.000000e+00> : vector<8xf32>
    %72 = vector.multi_reduction <add>, %71, %cst_26 [1] : vector<8x128xf32> to vector<8xf32>
    %73 = vector.shape_cast %72 : vector<8xf32> to vector<8x1xf32>
    %cst_27 = arith.constant 2.000000e+00 : f32
    %cst_28 = arith.constant 1.000000e+00 : f32
    %74 = arith.mulf %cst_27, %cst_28 : f32
    %75 = vector.broadcast %74 : f32 to vector<8x1xf32>
    %76 = arith.mulf %75, %73 : vector<8x1xf32>
    %cst_29 = arith.constant 1.000000e+00 : f32
    %77 = vector.broadcast %cst_29 : f32 to vector<8x1xf32>
    %78 = arith.addf %77, %76 : vector<8x1xf32>
    %cst_30 = arith.constant 1.000000e+00 : f32
    %79 = vector.broadcast %cst_30 : f32 to vector<1x1xf32>
    %80 = arith.mulf %79, %69 : vector<1x1xf32>
    %81 = vector.broadcast %80 : vector<1x1xf32> to vector<8x1xf32>
    %82 = arith.addf %78, %81 : vector<8x1xf32>
    %83 = vector.broadcast %82 : vector<8x1xf32> to vector<8x128xf32>
    %84 = arith.mulf %83, %63 : vector<8x128xf32>
    %cst_31 = arith.constant 1.000000e+00 : f32
    %85 = vector.broadcast %cst_31 : f32 to vector<8x1xf32>
    %86 = arith.mulf %85, %66 : vector<8x1xf32>
    %cst_32 = arith.constant 1.000000e+00 : f32
    %87 = vector.broadcast %cst_32 : f32 to vector<8x1xf32>
    %88 = arith.subf %87, %86 : vector<8x1xf32>
    %89 = vector.broadcast %88 : vector<8x1xf32> to vector<8x128xf32>
    %90 = vector.broadcast %2 : vector<1x128xf32> to vector<8x128xf32>
    %91 = arith.mulf %89, %90 : vector<8x128xf32>
    %92 = arith.addf %84, %91 : vector<8x128xf32>
    %cst_33 = arith.constant 2.000000e+00 : f32
    %cst_34 = arith.constant 1.000000e+00 : f32
    %93 = arith.mulf %cst_33, %cst_34 : f32
    %94 = vector.broadcast %93 : f32 to vector<8x1xf32>
    %95 = arith.mulf %94, %73 : vector<8x1xf32>
    %cst_35 = arith.constant 1.000000e+00 : f32
    %96 = vector.broadcast %cst_35 : f32 to vector<8x1xf32>
    %97 = arith.addf %96, %95 : vector<8x1xf32>
    %cst_36 = arith.constant 1.000000e+00 : f32
    %cst_37 = arith.constant 1.000000e+00 : f32
    %98 = arith.mulf %cst_36, %cst_37 : f32
    %99 = vector.broadcast %98 : f32 to vector<8x1xf32>
    %100 = arith.mulf %99, %66 : vector<8x1xf32>
    %101 = vector.broadcast %69 : vector<1x1xf32> to vector<8x1xf32>
    %102 = arith.mulf %100, %101 : vector<8x1xf32>
    %103 = arith.addf %97, %102 : vector<8x1xf32>
    %cst_38 = arith.constant 1.000000e-15 : f32
    %104 = vector.broadcast %cst_38 : f32 to vector<8x1xf32>
    %105 = arith.maximumf %103, %104 : vector<8x1xf32>
    %cst_39 = arith.constant 1.000000e+00 : f32
    %106 = vector.broadcast %cst_39 : f32 to vector<8x1xf32>
    %107 = arith.divf %106, %105 : vector<8x1xf32>
    %108 = vector.broadcast %107 : vector<8x1xf32> to vector<8x128xf32>
    %109 = arith.mulf %92, %108 : vector<8x128xf32>
    %110 = arith.mulf %109, %109 : vector<8x128xf32>
    %cst_40 = arith.constant dense<0.000000e+00> : vector<8xf32>
    %111 = vector.multi_reduction <add>, %110, %cst_40 [1] : vector<8x128xf32> to vector<8xf32>
    %112 = vector.shape_cast %111 : vector<8xf32> to vector<8x1xf32>
    %113 = math.sqrt %112 : vector<8x1xf32>
    %cst_41 = arith.constant 1.000000e-15 : f32
    %114 = vector.broadcast %cst_41 : f32 to vector<8x1xf32>
    %115 = arith.maximumf %113, %114 : vector<8x1xf32>
    %cst_42 = arith.constant 0.995999991 : f32
    %cst_43 = arith.constant 1.000000e+00 : f32
    %116 = arith.divf %cst_42, %cst_43 : f32
    %117 = vector.broadcast %116 : f32 to vector<8x1xf32>
    %118 = arith.divf %117, %115 : vector<8x1xf32>
    %119 = vector.broadcast %116 : f32 to vector<8x1xf32>
    %120 = arith.cmpf ogt, %115, %119 : vector<8x1xf32>
    %121 = vector.broadcast %118 : vector<8x1xf32> to vector<8x128xf32>
    %122 = arith.mulf %109, %121 : vector<8x128xf32>
    %123 = vector.shape_cast %120 : vector<8x1xi1> to vector<8x1xi1>
    %124 = vector.broadcast %123 : vector<8x1xi1> to vector<8x128xi1>
    %125 = arith.select %124, %122, %109 : vector<8x128xi1>, vector<8x128xf32>
    %c0_44 = arith.constant 0 : index
    %c0_45 = arith.constant 0 : index
    %126 = vector.load %arg4[%c0_44, %c0_45] : memref<8x128xf32, #tpu.memory_space<vmem>>, vector<8x128xf32>
    tpu.vector_store %arg4[%c0_44, %c0_45], %125 {strides = array<i32>} : memref<8x128xf32, #tpu.memory_space<vmem>>, vector<8x128xf32>,
    return
  }
  func.func @transform_0(%arg0: i32) -> (i32, i32) {
    %c0_i32 = arith.constant 0 : i32
    %c0_i32_0 = arith.constant 0 : i32
    return %arg0, %c0_i32 : i32, i32
  }
  func.func @transform_1(%arg0: i32) -> (i32, i32) {
    %c0_i32 = arith.constant 0 : i32
    %c0_i32_0 = arith.constant 0 : i32
    %c0_i32_1 = arith.constant 0 : i32
    return %c0_i32, %c0_i32_0 : i32, i32
  }
  func.func @transform_2(%arg0: i32) -> (i32, i32) {
    %c0_i32 = arith.constant 0 : i32
    %c0_i32_0 = arith.constant 0 : i32
    %c0_i32_1 = arith.constant 0 : i32
    return %c0_i32, %c0_i32_0 : i32, i32
  }
  func.func @transform_3(%arg0: i32) -> (i32, i32) {
    %c0_i32 = arith.constant 0 : i32
    %c0_i32_0 = arith.constant 0 : i32
    return %arg0, %c0_i32 : i32, i32
  }
}

</mosaic_0001>

<llo_original>
// kernel: tpu_custom_call.1
$region0: #{tpu_custom_call.1}
  #allocation0 [shape = 'u32[]', space=smem, size = 0x4, offset = 0x4, fixed_abs, tag = 'smem constant byte address 0x4 - core index']
  #allocation1 [shape = 'u32[144,128]{1,0:T(1,128)}', space=vmem, size = 0x12000, scoped, tag = 'internal scratch']
  %s0 = inlined_call_operand.hbm [shape: f32[16,128], index: 0, kind: input, shape index: {}]
  %s1 = inlined_call_operand.hbm [shape: f32[128,128], index: 1, kind: input, shape index: {}]
  %s2 = inlined_call_operand.vmem [shape: f32[1,128], index: 2, kind: input, shape index: {}]
  %s3 = inlined_call_operand.hbm [shape: f32[16,128], index: 3, kind: output, shape index: {}]
  %s4 = sld [smem:[#allocation0]]
  $region53: #{tpu_custom_call.1} parent=0
    _
  %s6 = ssub.s32 1, %s4
  %s7 = scalar_select 0, %s6, %s4
  $region1: #{tpu_custom_call.1} parent=0
    #allocation2 [shape = 'u8[8192]{0}', space=vmem, size = 0x2000, scoped, tag = 'input window, operand 0']
    #allocation3 [shape = 's32[2]{0}', space=sflag, size = 0x8, scoped, tag = 'scoped memory for tpu_custom_call.1']
    #allocation4 [shape = 's32[2]{0}', space=sflag, size = 0x8, scoped, tag = 'scoped memory for tpu_custom_call.1']
    #allocation5 [shape = 'u8[65536]{0}', space=vmem, size = 0x10000, scoped, tag = 'input window, operand 1, single buffered']
    #allocation6 [shape = 's32[1]{0}', space=sflag, size = 0x4, scoped, tag = 'scoped memory for tpu_custom_call.1']
    #allocation7 [shape = 'u8[8192]{0}', space=vmem, size = 0x2000, scoped, tag = 'output window, operand 0']
    %8 = vsyncpa [#allocation3], 0
    %s9 = scalar_lea.sflag [#allocation3], 1
    %10 = vsyncpa %s9, 0
    %11 = vsyncpa [#allocation6], 0
    %12 = vsyncpa [#allocation4], 0
    %s13 = scalar_lea.sflag [#allocation4], 1
    %14 = vsyncpa %s13, 0
    loop: start=0, step=1, limit=4
    $region2: #{tpu_custom_call.1} parent=1 // loop_pre_header
      _
    $region3: #{tpu_custom_call.1} parent=1 // loop_header
      %s16 = sphi 0, %s20
      %p17 = scmp.ge.s32.totalorder %s16, 4
      %s26 = sphi 0, %s28
      %s29 = sphi 0, %s26
      %s30 = sphi 0, %s29
      %s46 = sphi 0, %s30
      %s50 = sphi 0, %s50
      %s52 = sphi 0, %s50
      %s53 = sphi 0, %s52
      %s67 = sphi 0, %s53
      %s71 = sphi 0, %s71
      %s73 = sphi 0, %s71
      %s74 = sphi 0, %s73
      %s88 = sphi 0, %s74
      %s94 = sphi 0, %s96
      %s97 = sphi 0, %s94
      %s98 = sphi 0, %s97
      %s114 = sphi 0, %s98
    $region4: #{tpu_custom_call.1} parent=1 // loop_header_branch
      %19 = sbr.rel (%p17) target = $region8
    $region5: #{tpu_custom_call.1} parent=1 // loop_body
      %s21 = ssub.s32 %s16, 1
      %s22 = ssub.s32 %s16, 2
      %s23 = sadd.s32 %s16, 1
      %s24 = ssub.s32 %s16, %s23
      %p25 = scmp.eq.s32.totalorder %s24, 0
      %s27 = sadd.s32 %s26, 1
      %s28 = scalar_select %p25, %s26, %s27
      %p31 = pneg %p25
      %p32 = scmp.eq.s32.totalorder %s16, 1
      %p33 = por %p31, %p32
      %p34 = scmp.ne.s32.totalorder %s26, %s29
      %p35 = scmp.eq.s32.totalorder %s16, 0
      %p36 = por %p34, %p35
      %p37 = scmp.ne.s32.totalorder %s26, %s29
      %p38 = scmp.eq.s32.totalorder %s21, 1
      %p39 = por %p37, %p38
      %p40 = scmp.ne.s32.totalorder %s29, %s30
      %p41 = scmp.eq.s32.totalorder %s21, 0
      %p42 = por %p40, %p41
      %p43 = scmp.ne.s32.totalorder %s29, %s30
      %p44 = scmp.eq.s32.totalorder %s22, 1
      %p45 = por %p43, %p44
      %p47 = scmp.ne.s32.totalorder %s30, %s46
      %p48 = scmp.eq.s32.totalorder %s22, 0
      %p49 = por %p47, %p48
      %s51 = sadd.s32 %s50, 1
      %p54 = scmp.eq.s32.totalorder %s16, 1
      %p55 = scmp.ne.s32.totalorder %s50, %s52
      %p56 = scmp.eq.s32.totalorder %s16, 0
      %p57 = por %p55, %p56
      %p58 = scmp.ne.s32.totalorder %s50, %s52
      %p59 = scmp.eq.s32.totalorder %s21, 1
      %p60 = por %p58, %p59
      %p61 = scmp.ne.s32.totalorder %s52, %s53
      %p62 = scmp.eq.s32.totalorder %s21, 0
      %p63 = por %p61, %p62
      %p64 = scmp.ne.s32.totalorder %s52, %s53
      %p65 = scmp.eq.s32.totalorder %s22, 1
      %p66 = por %p64, %p65
      %p68 = scmp.ne.s32.totalorder %s53, %s67
      %p69 = scmp.eq.s32.totalorder %s22, 0
      %p70 = por %p68, %p69
      %s72 = sadd.s32 %s71, 1
      %p75 = scmp.eq.s32.totalorder %s16, 1
      %p76 = scmp.ne.s32.totalorder %s71, %s73
      %p77 = scmp.eq.s32.totalorder %s16, 0
      %p78 = por %p76, %p77
      %p79 = scmp.ne.s32.totalorder %s71, %s73
      %p80 = scmp.eq.s32.totalorder %s21, 1
      %p81 = por %p79, %p80
      %p82 = scmp.ne.s32.totalorder %s73, %s74
      %p83 = scmp.eq.s32.totalorder %s21, 0
      %p84 = por %p82, %p83
      %p85 = scmp.ne.s32.totalorder %s73, %s74
      %p86 = scmp.eq.s32.totalorder %s22, 1
      %p87 = por %p85, %p86
      %p89 = scmp.ne.s32.totalorder %s74, %s88
      %p90 = scmp.eq.s32.totalorder %s22, 0
      %p91 = por %p89, %p90
      %s92 = ssub.s32 %s16, %s23
      %p93 = scmp.eq.s32.totalorder %s92, 0
      %s95 = sadd.s32 %s94, 1
      %s96 = scalar_select %p93, %s94, %s95
      %p99 = pneg %p93
      %p100 = scmp.eq.s32.totalorder %s16, 1
      %p101 = por %p99, %p100
      %p102 = scmp.ne.s32.totalorder %s94, %s97
      %p103 = scmp.eq.s32.totalorder %s16, 0
      %p104 = por %p102, %p103
      %p105 = scmp.ne.s32.totalorder %s94, %s97
      %p106 = scmp.eq.s32.totalorder %s21, 1
      %p107 = por %p105, %p106
      %p108 = scmp.ne.s32.totalorder %s97, %s98
      %p109 = scmp.eq.s32.totalorder %s21, 0
      %p110 = por %p108, %p109
      %p111 = scmp.ne.s32.totalorder %s97, %s98
      %p112 = scmp.eq.s32.totalorder %s22, 1
      %p113 = por %p111, %p112
      %p115 = scmp.ne.s32.totalorder %s98, %s114
      %p116 = scmp.eq.s32.totalorder %s22, 0
      %p117 = por %p115, %p116
      %p118 = scmp.le.s32.totalorder 1, %s16
      %p119 = scmp.lt.s32.totalorder %s16, 3
      %p120 = pnand %p118, %p119
      %p121 = pneg %p120
      // Predicated region
      $region9: #{tpu_custom_call.1} parent=5 // pred_check
        _
      $region10: #{tpu_custom_call.1} parent=5 // pred_check_branch
        %123 = sbr.rel (%p120) target = $region12
      $region11: #{tpu_custom_call.1} parent=5 // pred_region
        %s124 = ssub.s32 %s16, 1
        // Predicated region
        $region13: #{tpu_custom_call.1} parent=11 // pred_check
          %p125 = pneg %p63
        $region14: #{tpu_custom_call.1} parent=11 // pred_check_branch
          %127 = sbr.rel (%p125) target = $region16
        $region15: #{tpu_custom_call.1} parent=11 // pred_region
          %s129 = ssub.s32 2048, 2048
          %130 = vsyncadd [#allocation6], %s129
          %s131 = sshll.u32 [#allocation5], 4
          %s132 = int_to_ptr.vmem [resolvable:$true] %s131
          %137 = dma.hbm_to_vmem [thread:$0]  %s1, 2048, %s132, [#allocation6], 128, 128, 8
        $region16: #{tpu_custom_call.1} parent=11 // pred_fallthru
          _
        // Predicated region
        $region17: #{tpu_custom_call.1} parent=11 // pred_check
          %p138 = pneg %p84
        $region18: #{tpu_custom_call.1} parent=11 // pred_check_branch
          %140 = sbr.rel (%p138) target = $region20
        $region19: #{tpu_custom_call.1} parent=11 // pred_region
          _
        $region20: #{tpu_custom_call.1} parent=11 // pred_fallthru
          _
      $region12: #{tpu_custom_call.1} parent=5 // pred_fallthru
        _
      %p141 = scmp.lt.s32.totalorder %s16, 2
      // Predicated region
      $region21: #{tpu_custom_call.1} parent=5 // pred_check
        %p142 = pneg %p141
      $region22: #{tpu_custom_call.1} parent=5 // pred_check_branch
        %144 = sbr.rel (%p142) target = $region24
      $region23: #{tpu_custom_call.1} parent=5 // pred_region
        // Predicated region
        $region25: #{tpu_custom_call.1} parent=23 // pred_check
          %p145 = pneg %p36
        $region26: #{tpu_custom_call.1} parent=23 // pred_check_branch
          %147 = sbr.rel (%p145) target = $region28
        $region27: #{tpu_custom_call.1} parent=23 // pred_region
          %s148 = sand.u32 %s26, 1
          %s149 = scalar_lea.sflag [#allocation3], %s148
          %s150 = sand.u32 %s26, 1
          %s151 = smul.addr %s150, 8
          %s152 = scalar_lea.vmem [#allocation2], %s151
          %s154 = ssub.s32 128, 128
          %155 = vsyncadd %s149, %s154
          %s156 = smul.addr %s16, 128
          %s157 = scalar_lea.hbm %s0, %s156
          %s159 = sshll.u32 %s152, 4
          %s160 = int_to_ptr.vmem [resolvable:$true] %s159
          %162 = dma.hbm_to_vmem [thread:$0]  %s157, 128, %s160, %s149
        $region28: #{tpu_custom_call.1} parent=23 // pred_fallthru
          _
      $region24: #{tpu_custom_call.1} parent=5 // pred_fallthru
        _
      %p163 = scmp.le.s32.totalorder 1, %s16
      %p164 = scmp.lt.s32.totalorder %s16, 3
      %p165 = pnand %p163, %p164
      %p166 = pneg %p165
      // Predicated region
      $region29: #{tpu_custom_call.1} parent=5 // pred_check
        _
      $region30: #{tpu_custom_call.1} parent=5 // pred_check_branch
        %168 = sbr.rel (%p165) target = $region32
      $region31: #{tpu_custom_call.1} parent=5 // pred_region
        %s169 = ssub.s32 %s16, 1
        %s170 = sand.u32 %s29, 1
        %s171 = scalar_lea.sflag [#allocation3], %s170
        %s172 = sand.u32 %s29, 1
        %s173 = smul.addr %s172, 8
        %s174 = scalar_lea.vmem [#allocation2], %s173
        // Predicated region
        $region33: #{tpu_custom_call.1} parent=31 // pred_check
          %p175 = pneg %p42
        $region34: #{tpu_custom_call.1} parent=31 // pred_check_branch
          %177 = sbr.rel (%p175) target = $region36
        $region35: #{tpu_custom_call.1} parent=31 // pred_region
          %178 = dma.done %s171, 128
        $region36: #{tpu_custom_call.1} parent=31 // pred_fallthru
          _
        // Predicated region
        $region37: #{tpu_custom_call.1} parent=31 // pred_check
          %p179 = pneg %p63
        $region38: #{tpu_custom_call.1} parent=31 // pred_check_branch
          %181 = sbr.rel (%p179) target = $region40
        $region39: #{tpu_custom_call.1} parent=31 // pred_region
          %182 = dma.done [#allocation6], 2048
        $region40: #{tpu_custom_call.1} parent=31 // pred_fallthru
          _
        %s183 = sand.u32 %s29, 1
        %s184 = scalar_lea.sflag [#allocation3], %s183
        %s185 = sand.u32 %s29, 1
        %s186 = smul.addr %s185, 8
        %s187 = scalar_lea.vmem [#allocation2], %s186
        %p188 = pneg %p42
        %p189 = pneg %p39
        %p190 = pneg %p63
        %p191 = pneg %p60
        %p192 = pneg %p84
        %p193 = pneg %p81
        %p194 = pneg %p110
        %p195 = pneg %p107
        %s196 = sand.u32 %s97, 1
        %s197 = scalar_lea.sflag [#allocation4], %s196
        %s198 = sand.u32 %s97, 1
        %s199 = smul.addr %s198, 8
        %s200 = scalar_lea.vmem [#allocation7], %s199
        %v201 = vld [vmem:[%s174] sm:$0xff]
        %v202 = vld [vmem:[#allocation5] sm:$0xff]
        %v203 = vld [vmem:[#allocation5 + $0x8] sm:$0xff]
        %v204 = vld [vmem:[#allocation5 + $0x10] sm:$0xff]
        %v205 = vld [vmem:[#allocation5 + $0x18] sm:$0xff]
        %v206 = vld [vmem:[#allocation5 + $0x20] sm:$0xff]
        %v207 = vld [vmem:[#allocation5 + $0x28] sm:$0xff]
        %v208 = vld [vmem:[#allocation5 + $0x30] sm:$0xff]
        %v209 = vld [vmem:[#allocation5 + $0x38] sm:$0xff]
        %v210 = vld [vmem:[#allocation5 + $0x40] sm:$0xff]
        %v211 = vld [vmem:[#allocation5 + $0x48] sm:$0xff]
        %v212 = vld [vmem:[#allocation5 + $0x50] sm:$0xff]
        %v213 = vld [vmem:[#allocation5 + $0x58] sm:$0xff]
        %v214 = vld [vmem:[#allocation5 + $0x60] sm:$0xff]
        %v215 = vld [vmem:[#allocation5 + $0x68] sm:$0xff]
        %v216 = vld [vmem:[#allocation5 + $0x70] sm:$0xff]
        %v217 = vld [vmem:[#allocation5 + $0x78] sm:$0xff]
        %v218 = vld [vmem:[%s2] sm:$0x1]
        %v219 = vmul.f32 %v201, %v201
        %220 = vadd.xlane.f32.xlu0 %v219
        %v221 = vpop.xlane.xlu0 %220
        %v222 = vrsqrt.pop %v221
        %v223 = vmul.f32 %v221, %v222
        %vm224 = vcmp.eq.f32.partialorder %v221, inf
        %v225 = vsel %vm224, %v221, %v223
        %vm226 = vcmp.eq.f32.partialorder %v221, 0.0
        %v227 = vand.u32 %v221, 2147483648
        %v228 = vsel %vm226, %v227, %v225
        %v229 = vmax.f32 %v228, 1e-15
        %v230 = vrcp.pop %v229
        %v231 = vmul.f32 1.0, %v230
        %232 = vmatprep.subr.mxu0 0.0
        %233 = vmatpush1.msra.mxu0 %v202
        %234 = vmatprep.subr.mxu0 0.0
        %235 = vmatpush1.msra.mxu0 %v203
        %236 = vmatprep.subr.mxu0 0.0
        %237 = vmatpush1.msra.mxu0 %v204
        %238 = vmatprep.subr.mxu0 0.0
        %239 = vmatpush1.msra.mxu0 %v205
        %240 = vmatprep.subr.mxu0 0.0
        %241 = vmatpush1.msra.mxu0 %v206
        %242 = vmatprep.subr.mxu0 0.0
        %243 = vmatpush1.msra.mxu0 %v207
        %244 = vmatprep.subr.mxu0 0.0
        %245 = vmatpush1.msra.mxu0 %v208
        %246 = vmatprep.subr.mxu0 0.0
        %247 = vmatpush1.msra.mxu0 %v209
        %248 = vmatprep.subr.mxu0 0.0
        %249 = vmatpush1.msra.mxu0 %v210
        %250 = vmatprep.subr.mxu0 0.0
        %251 = vmatpush1.msra.mxu0 %v211
        %252 = vmatprep.subr.mxu0 0.0
        %253 = vmatpush1.msra.mxu0 %v212
        %254 = vmatprep.subr.mxu0 0.0
        %255 = vmatpush1.msra.mxu0 %v213
        %256 = vmatprep.subr.mxu0 0.0
        %257 = vmatpush1.msra.mxu0 %v214
        %258 = vmatprep.subr.mxu0 0.0
        %259 = vmatpush1.msra.mxu0 %v215
        %260 = vmatprep.subr.mxu0 0.0
        %261 = vmatpush1.msra.mxu0 %v216
        %262 = vmatprep.subr.mxu0 0.0
        %263 = vmatpush1.msra.mxu0 %v217
        %264 = vmatprep.subr.mxu0 0.0
        %265 = vmatpush1.msra.mxu0 0.0
        %266 = vmatprep.subr.mxu0 0.0
        %267 = vmatpush1.msra.mxu0 0.0
        %268 = vmatprep.subr.mxu0 0.0
        %269 = vmatpush1.msra.mxu0 0.0
        %270 = vmatprep.subr.mxu0 0.0
        %271 = vmatpush1.msra.mxu0 0.0
        %272 = vmatprep.subr.mxu0 0.0
        %273 = vmatpush1.msra.mxu0 0.0
        %274 = vmatprep.subr.mxu0 0.0
        %275 = vmatpush1.msra.mxu0 0.0
        %276 = vmatprep.subr.mxu0 0.0
        %277 = vmatpush1.msra.mxu0 0.0
        %278 = vmatprep.subr.mxu0 0.0
        %279 = vmatpush1.msra.mxu0 0.0
        %280 = vmatprep.subr.mxu0 0.0
        %281 = vmatpush1.msra.mxu0 0.0
        %282 = vmatprep.subr.mxu0 0.0
        %283 = vmatpush1.msra.mxu0 0.0
        %284 = vmatprep.subr.mxu0 0.0
        %285 = vmatpush1.msra.mxu0 0.0
        %286 = vmatprep.subr.mxu0 0.0
        %287 = vmatpush1.msra.mxu0 0.0
        %288 = vmatprep.subr.mxu0 0.0
        %289 = vmatpush1.msra.mxu0 0.0
        %290 = vmatprep.subr.mxu0 0.0
        %291 = vmatpush1.msra.mxu0 0.0
        %292 = vmatprep.subr.mxu0 0.0
        %293 = vmatpush1.msra.mxu0 0.0
        %294 = vmatprep.subr.mxu0 0.0
        %295 = vmatpush1.msra.mxu0 0.0
        %296 = vmatprep.mubr.f32.mxu0 0.0
        %297 = vmatmul.mubr.f32.gmra.mrb[0].mxu0 %v201
        %v298 = vpop.f32.mrb[0].mxu0
        %v299 = vadd.f32 0.0, %v298
        %v300 = vpop.f32.mrb[0].mxu0
        %301 = vdwg.mxu0
        %v302 = vmul.f32 %v299, %v299
        %303 = vadd.xlane.f32.xlu0 %v302
        %v304 = vpop.xlane.xlu0 %303
        %v305 = vrsqrt.pop %v304
        %v306 = vmul.f32 %v304, %v305
        %vm307 = vcmp.eq.f32.partialorder %v304, inf
        %v308 = vsel %vm307, %v304, %v306
        %vm309 = vcmp.eq.f32.partialorder %v304, 0.0
        %v310 = vand.u32 %v304, 2147483648
        %v311 = vsel %vm309, %v310, %v308
        %v312 = vmax.f32 %v311, 1e-15
        %v313 = vrcp.pop %v312
        %v314 = vmul.f32 1.0, %v313
        %v315 = vmul.f32 %v312, %v231
        %v316 = vmax.f32 %v229, -0.9999999
        %v317 = vmin.f32 %v316, 0.9999999
        %v318 = vadd.f32 %v317, 1.0
        %v319 = vsub.f32 1.0, %v317
        %v320 = vrcp.pop %v319
        %v321 = vmul.f32 %v318, %v320
        %v322 = vlog2.pop %v321
        %v323 = vmul.f32 %v322, 0.6931472
        %v324 = vmul.f32 %v323, 0.5
        %v325 = vmul.f32 %v315, %v324
        %v326 = vtanh.pop %v325
        %v327 = vmul.f32 %v326, %v314
        %v328 = vmul.f32 %v299, %v327
        %vm329 = vcmp.eq.f32.partialorder %v304, 0.0
        %v330 = vsel %vm329, 1, 0
        %vm331 = vcmp.eq.s32.totalorder %v330, 1
        %v332 = vsel %vm331, 0.0, %v328
        %v333 = vmul.f32 %v332, %v332
        %334 = vadd.xlane.f32.xlu0 %v333
        %v335 = vpop.xlane.xlu0 %334
        %v336 = vrsqrt.pop %v335
        %v337 = vmul.f32 %v335, %v336
        %vm338 = vcmp.eq.f32.partialorder %v335, inf
        %v339 = vsel %vm338, %v335, %v337
        %vm340 = vcmp.eq.f32.partialorder %v335, 0.0
        %v341 = vand.u32 %v335, 2147483648
        %v342 = vsel %vm340, %v341, %v339
        %v343 = vmax.f32 %v342, 1e-15
        %v344 = vrcp.pop %v343
        %v345 = vmul.f32 0.996, %v344
        %vm346 = vcmp.gt.f32.partialorder %v343, 0.996
        %v347 = vmul.f32 %v332, %v345
        %v348 = vsel %vm346, 1, 0
        %vm349 = vcmp.eq.s32.totalorder %v348, 1
        %v350 = vsel %vm349, %v347, %v332
        %v351 = vmul.f32 %v350, %v350
        %352 = vadd.xlane.f32.xlu0 %v351
        %v353 = vpop.xlane.xlu0 %352
        %v354 = vmul.f32 %v218, %v218
        %vm355 = vcmask 1040384
        %v356 = vsel %vm355, %v354, 0.0
        %357 = vadd.xlane.f32.xlu0 %v356
        %v358 = vpop.xlane.xlu0 %357
        %v360 = vlaneseq
        %v361 = vshrl.u32 %v360, 7
        %v362 = vsub.s32 0, %v361
        %v363 = vrot.slane %v218, %v362
        %v365 = vmul.f32 %v350, %v363
        %366 = vadd.xlane.f32.xlu0 %v365
        %v367 = vpop.xlane.xlu0 %366
        %v368 = vmul.f32 %v367, 2.0
        %v369 = vadd.f32 %v368, 1.0
        %v370 = vlaneseq
        %v371 = vshrl.u32 %v370, 7
        %v372 = vsub.s32 0, %v371
        %v373 = vrot.slane %v358, %v372
        %v374 = vadd.f32 %v369, %v373
        %v375 = vmul.f32 %v374, %v350
        %v376 = vsub.f32 1.0, %v353
        %v377 = vmul.f32 %v376, %v363
        %v378 = vadd.f32 %v375, %v377
        %v379 = vmul.f32 %v353, %v373
        %v380 = vadd.f32 %v369, %v379
        %v381 = vmax.f32 %v380, 1e-15
        %v382 = vrcp.pop %v381
        %v383 = vmul.f32 1.0, %v382
        %v384 = vmul.f32 %v378, %v383
        %v385 = vmul.f32 %v384, %v384
        %386 = vadd.xlane.f32.xlu0 %v385
        %v387 = vpop.xlane.xlu0 %386
        %v388 = vrsqrt.pop %v387
        %v389 = vmul.f32 %v387, %v388
        %vm390 = vcmp.eq.f32.partialorder %v387, inf
        %v391 = vsel %vm390, %v387, %v389
        %vm392 = vcmp.eq.f32.partialorder %v387, 0.0
        %v393 = vand.u32 %v387, 2147483648
        %v394 = vsel %vm392, %v393, %v391
        %v395 = vmax.f32 %v394, 1e-15
        %v396 = vrcp.pop %v395
        %v397 = vmul.f32 0.996, %v396
        %vm398 = vcmp.gt.f32.partialorder %v395, 0.996
        %v399 = vmul.f32 %v384, %v397
        %v400 = vsel %vm398, 1, 0
        %vm401 = vcmp.eq.s32.totalorder %v400, 1
        %v402 = vsel %vm401, %v399, %v384
        %403 = vst [vmem:[%s200] sm:$0xff] %v402
        %s404 = sand.u32 %s97, 1
        %s405 = scalar_lea.sflag [#allocation4], %s404
        %s406 = sand.u32 %s97, 1
        %s407 = smul.addr %s406, 8
        %s408 = scalar_lea.vmem [#allocation7], %s407
        // Predicated region
        $region41: #{tpu_custom_call.1} parent=31 // pred_check
          %p409 = pneg %p107
        $region42: #{tpu_custom_call.1} parent=31 // pred_check_branch
          %411 = sbr.rel (%p409) target = $region44
        $region43: #{tpu_custom_call.1} parent=31 // pred_region
          %s413 = ssub.s32 128, 128
          %414 = vsyncadd %s405, %s413
          %s415 = smul.addr %s21, 128
          %s416 = scalar_lea.hbm %s3, %s415
          %s418 = sshll.u32 %s408, 4
          %s419 = int_to_ptr.vmem [resolvable:$true] %s418
          %421 = dma.vmem_to_hbm [thread:$0]  %s419, 128, %s416, %s405
        $region44: #{tpu_custom_call.1} parent=31 // pred_fallthru
          _
      $region32: #{tpu_custom_call.1} parent=5 // pred_fallthru
        _
      %p422 = scmp.le.s32.totalorder 2, %s16
      // Predicated region
      $region45: #{tpu_custom_call.1} parent=5 // pred_check
        %p423 = pneg %p422
      $region46: #{tpu_custom_call.1} parent=5 // pred_check_branch
        %425 = sbr.rel (%p423) target = $region48
      $region47: #{tpu_custom_call.1} parent=5 // pred_region
        %s426 = ssub.s32 %s16, 2
        // Predicated region
        $region49: #{tpu_custom_call.1} parent=47 // pred_check
          %p427 = pneg %p113
        $region50: #{tpu_custom_call.1} parent=47 // pred_check_branch
          %429 = sbr.rel (%p427) target = $region52
        $region51: #{tpu_custom_call.1} parent=47 // pred_region
          %s430 = sand.u32 %s98, 1
          %s431 = scalar_lea.sflag [#allocation4], %s430
          %s432 = sand.u32 %s98, 1
          %s433 = smul.addr %s432, 8
          %s434 = scalar_lea.vmem [#allocation7], %s433
          %435 = dma.done %s431, 128
        $region52: #{tpu_custom_call.1} parent=47 // pred_fallthru
          _
      $region48: #{tpu_custom_call.1} parent=5 // pred_fallthru
        _
    $region6: #{tpu_custom_call.1} parent=1 // loop_footer
      %s20 = sadd.s32 1, %s16
    $region7: #{tpu_custom_call.1} parent=1 // loop_footer_branch
      %15 = sbr.rel target = $region3
    $region8: #{tpu_custom_call.1} parent=1 // loop_exit
      _
    %436 = vsyncpa [#allocation3], 1
    %s437 = scalar_lea.sflag [#allocation3], 1
    %438 = vsyncpa %s437, 1
    %439 = vsyncpa [#allocation6], 1
    %440 = vsyncpa [#allocation4], 1
    %s441 = scalar_lea.sflag [#allocation4], 1
    %442 = vsyncpa %s441, 1

</llo_original>
